<compile_context>
chip_gen: v5e
topology: v5e:2x2
jax: 0.10.0
libtpu: 0.0.40
codegen_flags: <defaults>
</compile_context>

<pallas_src>
import jax
import jax.numpy as jnp
from jax.experimental import pallas as pl
from jax.experimental.pallas import tpu as pltpu


def ceum_loss_kernel(x0_ref, x1_ref, ty_ref, w1_ref, b1_ref, whT_ref, bhT_ref,
                     out_ref):
    # Concatenate the two equal-size mini-batches along the batch (sublane)
    # axis inside VMEM (no wrapper-side HBM copy of the feature matrices).
    x = jnp.concatenate([x0_ref[...], x1_ref[...]], axis=0)     # (2B, F) bf16

    # Shared hidden tower: bf16 MXU matmul, f32 accumulate / bias / relu.
    h = jnp.dot(x, w1_ref[...], preferred_element_type=jnp.float32) + b1_ref[...]
    h = jnp.maximum(h, 0.0)                                      # (2B, H) f32

    # Fused control/uplift heads, lane-dense output:
    # (2, H) bf16  contracted with  (2B, H) bf16  over H  -> (2, 2B) f32.
    headsT = jax.lax.dot_general(
        whT_ref[...], h.astype(jnp.bfloat16),
        dimension_numbers=(((1,), (1,)), ((), ())),
        preferred_element_type=jnp.float32) + bhT_ref[...]       # (2, 2B)

    mu_c = headsT[0:1, :]                                        # (1, 2B)
    tau = headsT[1:2, :]                                         # (1, 2B)
    t = ty_ref[0:1, :]                                           # (1, 2B)
    y = ty_ref[1:2, :]                                           # (1, 2B)

    logit = mu_c + t * tau                                       # (1, 2B)

    # Numerically stable BCE-with-logits per sample (exp/log1p hit the EUP).
    per_sample = (jnp.maximum(logit, 0.0) - logit * y
                  + jnp.log1p(jnp.exp(-jnp.abs(logit))))         # (1, 2B)

    # Scalar loss straight to SMEM.
    out_ref[0, 0] = jnp.mean(per_sample)


def wrapper_model_forward(params,
                          feature_list, is_treat, label_list,
                          feature_list1, is_treat1, label_list1):
    """Equivalent of WrapperModel.forward(...): returns a scalar loss."""
    B, F = feature_list.shape
    assert feature_list1.shape == (B, F), "both mini-batches must share B"

    # Pack the four per-row signals into one lane-dense (2, 2B) f32 buffer:
    # row 0 = [t0 | t1], row 1 = [y0 | y1]  (batch0 lanes first, then batch1,
    # matching the sublane concat order of x inside the kernel).
    t = jnp.concatenate([is_treat.reshape(1, B),
                         is_treat1.reshape(1, B)], axis=1)
    y = jnp.concatenate([label_list.reshape(1, B),
                         label_list1.reshape(1, B)], axis=1)
    ty = jnp.concatenate([t, y], axis=0).astype(jnp.float32)     # (2, 2B)

    # bf16 MXU operands; biases / pointwise math stay f32.
    x0 = feature_list.astype(jnp.bfloat16)
    x1 = feature_list1.astype(jnp.bfloat16)
    w1 = params["w1"].astype(jnp.bfloat16)                       # (F, H)
    # Fused + transposed heads: (2, H) bf16 weight, (2, 1) f32 bias.
    whT = jnp.concatenate([params["wc"], params["wu"]],
                          axis=1).T.astype(jnp.bfloat16)         # (2, H)
    bhT = jnp.concatenate([params["bc"], params["bu"]], axis=1).T  # (2, 1)

    vmem = pl.BlockSpec(memory_space=pltpu.MemorySpace.VMEM)
    out = pl.pallas_call(
        ceum_loss_kernel,
        out_shape=jax.ShapeDtypeStruct((1, 1), jnp.float32),
        in_specs=[vmem] * 7,
        out_specs=pl.BlockSpec(memory_space=pltpu.MemorySpace.SMEM),
    )(x0, x1, ty, w1, params["b1"], whT, bhT)
    return out[0, 0]


def _reference_forward(params, x0, t0, y0, x1, t1, y1):
    """Pure f32 JAX reference matching the original module's math."""
    def one(x, t, y):
        h = jnp.maximum(x @ params["w1"] + params["b1"], 0.0)
        mu_c = h @ params["wc"] + params["bc"]
        tau = h @ params["wu"] + params["bu"]
        logit = mu_c + t.reshape(-1, 1) * tau
        yy = y.reshape(-1, 1)
        loss = (jnp.maximum(logit, 0.0) - logit * yy
                + jnp.log1p(jnp.exp(-jnp.abs(logit))))
        return jnp.mean(loss)
    return 0.5 * (one(x0, t0, y0) + one(x1, t1, y1))


def init_params(key, F, H):
    k1, k2, k3 = jax.random.split(key, 3)
    return {
        "w1": (jax.random.normal(k1, (F, H), jnp.float32) * 0.1),
        "b1": jnp.zeros((1, H), jnp.float32),
        "wc": (jax.random.normal(k2, (H, 1), jnp.float32) * 0.1),
        "bc": jnp.zeros((1, 1), jnp.float32),
        "wu": (jax.random.normal(k3, (H, 1), jnp.float32) * 0.1),
        "bu": jnp.zeros((1, 1), jnp.float32),
    }


if __name__ == "__main__":
    B, F, H = 16, 32, 32
    key = jax.random.PRNGKey(0)
    kp, kx0, kt0, ky0, kx1, kt1, ky1 = jax.random.split(key, 7)

    params = init_params(kp, F, H)

    feature_list = jax.random.normal(kx0, (B, F), jnp.float32)
    is_treat = jax.random.bernoulli(kt0, 0.5, (B,)).astype(jnp.float32)
    label_list = jax.random.bernoulli(ky0, 0.3, (B,)).astype(jnp.float32)

    feature_list1 = jax.random.normal(kx1, (B, F), jnp.float32)
    is_treat1 = jax.random.bernoulli(kt1, 0.5, (B,)).astype(jnp.float32)
    label_list1 = jax.random.bernoulli(ky1, 0.3, (B,)).astype(jnp.float32)

    out = wrapper_model_forward(params,
                                feature_list, is_treat, label_list,
                                feature_list1, is_treat1, label_list1)
    out = jax.block_until_ready(out)

    ref = _reference_forward(params,
                             feature_list, is_treat, label_list,
                             feature_list1, is_treat1, label_list1)
    # bf16 MXU operands -> compare against the f32 reference at bf16 tolerance.
    assert jnp.allclose(out, ref, rtol=2e-2, atol=2e-2), (out, ref)

    print("KERNEL_OK")
</pallas_src>

<mosaic_0001>
module attributes {stable_mosaic.version = 11 : i64} {
  func.func @ceum_loss_kernel(%arg0: memref<16x32xbf16, #tpu.memory_space<vmem>>, %arg1: memref<16x32xbf16, #tpu.memory_space<vmem>>, %arg2: memref<2x32xf32, #tpu.memory_space<vmem>>, %arg3: memref<32x32xbf16, #tpu.memory_space<vmem>>, %arg4: memref<1x32xf32, #tpu.memory_space<vmem>>, %arg5: memref<2x32xbf16, #tpu.memory_space<vmem>>, %arg6: memref<2x1xf32, #tpu.memory_space<vmem>>, %arg7: memref<1x1xf32, #tpu.memory_space<smem>>) attributes {dimension_semantics = [], scalar_prefetch = 0 : i64, scratch_operands = 0 : i64, tpu.core_type = #tpu.core_type<tc>} {
    %c0 = arith.constant 0 : index
    %c0_0 = arith.constant 0 : index
    %0 = vector.load %arg0[%c0, %c0_0] : memref<16x32xbf16, #tpu.memory_space<vmem>>, vector<16x32xbf16>
    %c0_1 = arith.constant 0 : index
    %c0_2 = arith.constant 0 : index
    %1 = vector.load %arg1[%c0_1, %c0_2] : memref<16x32xbf16, #tpu.memory_space<vmem>>, vector<16x32xbf16>
    %2 = tpu.concatenate %0, %1 in 0 : vector<16x32xbf16>, vector<16x32xbf16> -> vector<32x32xbf16>
    %c0_3 = arith.constant 0 : index
    %c0_4 = arith.constant 0 : index
    %3 = vector.load %arg3[%c0_3, %c0_4] : memref<32x32xbf16, #tpu.memory_space<vmem>>, vector<32x32xbf16>
    %cst = arith.constant dense<0.000000e+00> : vector<32x32xf32>
    %4 = tpu.matmul %2, %3, %cst {dimension_numbers = #tpu.dot_dimension_numbers<[1], [0], [0], [1], [0, 0, 1, 1], [], []>} : vector<32x32xbf16>, vector<32x32xbf16>, vector<32x32xf32> -> vector<32x32xf32>
    %c0_5 = arith.constant 0 : index
    %c0_6 = arith.constant 0 : index
    %5 = vector.load %arg4[%c0_5, %c0_6] : memref<1x32xf32, #tpu.memory_space<vmem>>, vector<1x32xf32>
    %6 = vector.broadcast %5 : vector<1x32xf32> to vector<32x32xf32>
    %7 = arith.addf %4, %6 : vector<32x32xf32>
    %cst_7 = arith.constant 0.000000e+00 : f32
    %8 = vector.broadcast %cst_7 : f32 to vector<32x32xf32>
    %9 = arith.maximumf %7, %8 : vector<32x32xf32>
    %c0_8 = arith.constant 0 : index
    %c0_9 = arith.constant 0 : index
    %10 = vector.load %arg5[%c0_8, %c0_9] : memref<2x32xbf16, #tpu.memory_space<vmem>>, vector<2x32xbf16>
    %11 = arith.truncf %9 : vector<32x32xf32> to vector<32x32xbf16>
    %cst_10 = arith.constant dense<0.000000e+00> : vector<2x32xf32>
    %12 = tpu.matmul %10, %11, %cst_10 {dimension_numbers = #tpu.dot_dimension_numbers<[1], [1], [0], [0], [0, 0, 1, 0], [], []>} : vector<2x32xbf16>, vector<32x32xbf16>, vector<2x32xf32> -> vector<2x32xf32>
    %c0_11 = arith.constant 0 : index
    %c0_12 = arith.constant 0 : index
    %13 = vector.load %arg6[%c0_11, %c0_12] : memref<2x1xf32, #tpu.memory_space<vmem>>, vector<2x1xf32>
    %14 = vector.broadcast %13 : vector<2x1xf32> to vector<2x32xf32>
    %15 = arith.addf %12, %14 : vector<2x32xf32>
    %16 = vector.extract_strided_slice %15 {offsets = [0, 0], sizes = [1, 32], strides = [1, 1]} : vector<2x32xf32> to vector<1x32xf32>
    %17 = vector.extract_strided_slice %15 {offsets = [1, 0], sizes = [1, 32], strides = [1, 1]} : vector<2x32xf32> to vector<1x32xf32>
    %c0_13 = arith.constant 0 : index
    %c0_14 = arith.constant 0 : index
    %18 = vector.load %arg2[%c0_13, %c0_14] : memref<2x32xf32, #tpu.memory_space<vmem>>, vector<1x32xf32>
    %c1 = arith.constant 1 : index
    %c0_15 = arith.constant 0 : index
    %19 = vector.load %arg2[%c1, %c0_15] : memref<2x32xf32, #tpu.memory_space<vmem>>, vector<1x32xf32>
    %20 = arith.mulf %18, %17 : vector<1x32xf32>
    %21 = arith.addf %16, %20 : vector<1x32xf32>
    %cst_16 = arith.constant 0.000000e+00 : f32
    %22 = vector.broadcast %cst_16 : f32 to vector<1x32xf32>
    %23 = arith.maximumf %21, %22 : vector<1x32xf32>
    %24 = arith.mulf %21, %19 : vector<1x32xf32>
    %25 = arith.subf %23, %24 : vector<1x32xf32>
    %26 = math.absf %21 : vector<1x32xf32>
    %cst_17 = arith.constant 0.000000e+00 : f32
    %27 = vector.broadcast %cst_17 : f32 to vector<1x32xf32>
    %28 = arith.subf %27, %26 : vector<1x32xf32>
    %29 = math.exp %28 : vector<1x32xf32>
    %30 = math.log1p %29 : vector<1x32xf32>
    %31 = arith.addf %25, %30 : vector<1x32xf32>
    %32 = vector.shape_cast %31 : vector<1x32xf32> to vector<1x1x32xf32>
    %cst_18 = arith.constant dense<0.000000e+00> : vector<1xf32>
    %33 = vector.multi_reduction <add>, %32, %cst_18 [1, 2] : vector<1x1x32xf32> to vector<1xf32>
    %34 = vector.shape_cast %33 : vector<1xf32> to vector<1x1x1xf32>
    %35 = vector.extract %34[0, 0, 0] : f32 from vector<1x1x1xf32>
    %cst_19 = arith.constant 3.200000e+01 : f32
    %36 = arith.divf %35, %cst_19 : f32
    %c0_20 = arith.constant 0 : index
    %c0_21 = arith.constant 0 : index
    %37 = memref.load %arg7[%c0_20, %c0_21] : memref<1x1xf32, #tpu.memory_space<smem>>
    memref.store %36, %arg7[%c0_20, %c0_21] : memref<1x1xf32, #tpu.memory_space<smem>>
    return
  }
}

</mosaic_0001>

<llo_original>
// kernel: tpu_custom_call.1
$region0: #{tpu_custom_call.1}
  #allocation0 [shape = 'u32[]', space=smem, size = 0x4, offset = 0x4, fixed_abs, tag = 'smem constant byte address 0x4 - core index']
  #allocation1 [shape = 'u32[72,128]{1,0:T(1,128)}', space=vmem, size = 0x9000, scoped, tag = 'internal scratch']
  %s0 = inlined_call_operand.hbm [shape: bf16[16,32], index: 0, kind: input, shape index: {}]
  %s1 = inlined_call_operand.hbm [shape: bf16[16,32], index: 1, kind: input, shape index: {}]
  %s2 = inlined_call_operand.vmem [shape: f32[2,32], index: 2, kind: input, shape index: {}]
  %s3 = inlined_call_operand.hbm [shape: bf16[32,32], index: 3, kind: input, shape index: {}]
  %s4 = inlined_call_operand.vmem [shape: f32[1,32], index: 4, kind: input, shape index: {}]
  %s5 = inlined_call_operand.vmem [shape: bf16[2,32], index: 5, kind: input, shape index: {}]
  %s6 = inlined_call_operand.vmem [shape: f32[2,1], index: 6, kind: input, shape index: {}]
  %s7 = inlined_call_operand.hbm [shape: f32[1,1], index: 7, kind: output, shape index: {}]
  %s8 = sld [smem:[#allocation0]]
  $region50: #{tpu_custom_call.1} parent=0
    _
  %s10 = ssub.s32 1, %s8
  %s11 = scalar_select 0, %s10, %s8
  $region1: #{tpu_custom_call.1} parent=0
    #allocation2 [shape = 'u8[4096]{0}', space=vmem, size = 0x1000, scoped, tag = 'input window, operand 0, single buffered']
    #allocation3 [shape = 's32[1]{0}', space=sflag, size = 0x4, scoped, tag = 'scoped memory for tpu_custom_call.1']
    #allocation4 [shape = 's32[1]{0}', space=sflag, size = 0x4, scoped, tag = 'scoped memory for tpu_custom_call.1']
    #allocation5 [shape = 'u8[4096]{0}', space=vmem, size = 0x1000, scoped, tag = 'input window, operand 1, single buffered']
    #allocation6 [shape = 's32[1]{0}', space=sflag, size = 0x4, scoped, tag = 'scoped memory for tpu_custom_call.1']
    #allocation7 [shape = 'u8[8192]{0}', space=vmem, size = 0x2000, scoped, tag = 'input window, operand 3, single buffered']
    #allocation8 [shape = 'u8[512]{0}', space=smem, size = 0x200, scoped, tag = 'output window, operand 0, single buffered']
    %12 = vsyncpa [#allocation3], 0
    %13 = vsyncpa [#allocation6], 0
    %14 = vsyncpa [#allocation4], 0
    // Predicated region
    $region2: #{tpu_custom_call.1} parent=1 // pred_check
      _
    $region3: #{tpu_custom_call.1} parent=1 // pred_check_branch
      %16 = sbr.rel (0) target = $region5
    $region4: #{tpu_custom_call.1} parent=1 // pred_region
      %18 = vsyncadd [#allocation3], 0
      %s19 = sshll.u32 %s0, 4
      %s20 = int_to_ptr.hbm [resolvable:$true] %s19
      %s21 = sshll.u32 [#allocation2], 4
      %s22 = int_to_ptr.vmem [resolvable:$true] %s21
      %27 = dma.hbm_to_vmem [thread:$0]  %s20, 128, %s22, [#allocation3], 64, 64, 4
    $region5: #{tpu_custom_call.1} parent=1 // pred_fallthru
      _
    // Predicated region
    $region6: #{tpu_custom_call.1} parent=1 // pred_check
      _
    $region7: #{tpu_custom_call.1} parent=1 // pred_check_branch
      %29 = sbr.rel (0) target = $region9
    $region8: #{tpu_custom_call.1} parent=1 // pred_region
      %31 = vsyncadd [#allocation6], 0
      %s32 = sshll.u32 %s1, 4
      %s33 = int_to_ptr.hbm [resolvable:$true] %s32
      %s34 = sshll.u32 [#allocation5], 4
      %s35 = int_to_ptr.vmem [resolvable:$true] %s34
      %40 = dma.hbm_to_vmem [thread:$0]  %s33, 128, %s35, [#allocation6], 64, 64, 4
    $region9: #{tpu_custom_call.1} parent=1 // pred_fallthru
      _
    // Predicated region
    $region10: #{tpu_custom_call.1} parent=1 // pred_check
      _
    $region11: #{tpu_custom_call.1} parent=1 // pred_check_branch
      %42 = sbr.rel (0) target = $region13
    $region12: #{tpu_custom_call.1} parent=1 // pred_region
      _
    $region13: #{tpu_custom_call.1} parent=1 // pred_fallthru
      _
    // Predicated region
    $region14: #{tpu_custom_call.1} parent=1 // pred_check
      _
    $region15: #{tpu_custom_call.1} parent=1 // pred_check_branch
      %44 = sbr.rel (0) target = $region17
    $region16: #{tpu_custom_call.1} parent=1 // pred_region
      %46 = vsyncadd [#allocation6], 0
      %s47 = sshll.u32 %s3, 4
      %s48 = int_to_ptr.hbm [resolvable:$true] %s47
      %s49 = sshll.u32 [#allocation7], 4
      %s50 = int_to_ptr.vmem [resolvable:$true] %s49
      %55 = dma.hbm_to_vmem [thread:$0]  %s48, 256, %s50, [#allocation6], 64, 64, 4
    $region17: #{tpu_custom_call.1} parent=1 // pred_fallthru
      _
    // Predicated region
    $region18: #{tpu_custom_call.1} parent=1 // pred_check
      _
    $region19: #{tpu_custom_call.1} parent=1 // pred_check_branch
      %57 = sbr.rel (0) target = $region21
    $region20: #{tpu_custom_call.1} parent=1 // pred_region
      _
    $region21: #{tpu_custom_call.1} parent=1 // pred_fallthru
      _
    // Predicated region
    $region22: #{tpu_custom_call.1} parent=1 // pred_check
      _
    $region23: #{tpu_custom_call.1} parent=1 // pred_check_branch
      %59 = sbr.rel (0) target = $region25
    $region24: #{tpu_custom_call.1} parent=1 // pred_region
      _
    $region25: #{tpu_custom_call.1} parent=1 // pred_fallthru
      _
    // Predicated region
    $region26: #{tpu_custom_call.1} parent=1 // pred_check
      _
    $region27: #{tpu_custom_call.1} parent=1 // pred_check_branch
      %61 = sbr.rel (0) target = $region29
    $region28: #{tpu_custom_call.1} parent=1 // pred_region
      _
    $region29: #{tpu_custom_call.1} parent=1 // pred_fallthru
      _
    // Predicated region
    $region30: #{tpu_custom_call.1} parent=1 // pred_check
      _
    $region31: #{tpu_custom_call.1} parent=1 // pred_check_branch
      %63 = sbr.rel (0) target = $region33
    $region32: #{tpu_custom_call.1} parent=1 // pred_region
      %65 = dma.done [#allocation3], 128
    $region33: #{tpu_custom_call.1} parent=1 // pred_fallthru
      _
    // Predicated region
    $region34: #{tpu_custom_call.1} parent=1 // pred_check
      _
    $region35: #{tpu_custom_call.1} parent=1 // pred_check_branch
      %67 = sbr.rel (0) target = $region37
    $region36: #{tpu_custom_call.1} parent=1 // pred_region
      %69 = dma.done [#allocation6], 128
    $region37: #{tpu_custom_call.1} parent=1 // pred_fallthru
      _
    // Predicated region
    $region38: #{tpu_custom_call.1} parent=1 // pred_check
      _
    $region39: #{tpu_custom_call.1} parent=1 // pred_check_branch
      %71 = sbr.rel (0) target = $region41
    $region40: #{tpu_custom_call.1} parent=1 // pred_region
      %73 = dma.done [#allocation6], 256
    $region41: #{tpu_custom_call.1} parent=1 // pred_fallthru
      _
    %v75 = vld [vmem:[#allocation2] sm:$0xf]
    %v76 = vld [vmem:[#allocation2 + $0x4] sm:$0xf]
    %v77 = vld [vmem:[#allocation5] sm:$0xf]
    %v78 = vld [vmem:[#allocation5 + $0x4] sm:$0xf]
    %v81 = vunpack.c.l.b16 %v75
    %v82 = vunpack.c.l.b16 %v76
    %v83 = vpack.c.b16 %v82, %v81
    %v86 = vunpack.c.l.b16 %v77
    %v87 = vunpack.c.l.b16 %v78
    %v88 = vpack.c.b16 %v87, %v86
    %v89 = vld [vmem:[#allocation7] sm:$0xf]
    %v90 = vld [vmem:[#allocation7 + $0x4] sm:$0xf]
    %v91 = vld [vmem:[#allocation7 + $0x8] sm:$0xf]
    %v92 = vld [vmem:[#allocation7 + $0xc] sm:$0xf]
    %v93 = vld [vmem:[%s4] sm:$0x1]
    %v95 = vperm.slane %v93, 0
    %v101 = vunpack.c.l.b16 %v89
    %v102 = vunpack.c.l.b16 %v90
    %v103 = vunpack.c.l.b16 %v91
    %v104 = vunpack.c.l.b16 %v92
    %v105 = vpack.c.b16 %v102, %v101
    %v106 = vpack.c.b16 %v104, %v103
    %vm109 = vcmask 261120
    %v111 = vsel %vm109, %v83, 0
    %v114 = vsel %vm109, %v88, 0
    %116 = vmatpush.bf16.msra.mxu0 0
    %117 = vmatpush.bf16.msra.mxu0 0
    %118 = vmatpush.bf16.msra.mxu0 0
    %119 = vmatpush.bf16.msra.mxu0 0
    %120 = vmatpush.bf16.msra.mxu0 0
    %121 = vmatpush.bf16.msra.mxu0 0
    %122 = vmatpush.bf16.msra.mxu0 %v106
    %123 = vmatpush.bf16.msra.mxu0 %v105
    %124 = vmatmul.bf16.gmra.mxu0 %v111
    %v125 = vpop.f32.mrf.mxu0
    %v126 = vadd.f32 %v95, %v125
    %v127 = vpop.f32.mrf.mxu0
    %v128 = vadd.f32 %v95, %v127
    %129 = vmatmul.bf16.gmra.mxu0 %v114
    %v130 = vpop.f32.mrf.mxu0
    %v131 = vadd.f32 %v95, %v130
    %v132 = vpop.f32.mrf.mxu0
    %v133 = vadd.f32 %v95, %v132
    %134 = vdwg.mxu0
    %v135 = vmax.f32 %v126, 0.0
    %v136 = vmax.f32 %v128, 0.0
    %v137 = vmax.f32 %v131, 0.0
    %v138 = vmax.f32 %v133, 0.0
    %v139 = vld [vmem:[%s5] sm:$0x1]
    %v140 = vpack.c.bf16 %v136, %v135
    %v141 = vpack.c.bf16 %v138, %v137
    %v142 = vld [vmem:[%s6] sm:$0x3]
    %144 = vset.pattern.permute.xlu0 0
    %145 = vperm.xlu0 %144, %v142
    %v146 = vpop.permute.xlu0 %145
    %v149 = vsel %vm109, %v139, 0
    %v152 = vsel %vm109, %v140, 0
    %v155 = vsel %vm109, %v141, 0
    %157 = vmatpush.bf16.xpose.msra.mxu0 0
    %158 = vmatpush.bf16.xpose.msra.mxu0 0
    %159 = vmatpush.bf16.xpose.msra.mxu0 0
    %160 = vmatpush.bf16.xpose.msra.mxu0 0
    %161 = vmatpush.bf16.xpose.msra.mxu0 0
    %162 = vmatpush.bf16.xpose.msra.mxu0 0
    %163 = vmatpush.bf16.xpose.msra.mxu0 %v155
    %164 = vmatpush.bf16.xpose.msra.mxu0 %v152
    %165 = vmatmul.bf16.gmra.mxu0 %v149
    %v166 = vpop.f32.mrf.mxu0
    %v167 = vadd.f32 %v146, %v166
    %v168 = vpop.f32.mrf.mxu0
    %169 = vdwg.mxu0
    %v170 = vld [vmem:[%s2] sm:$0x1]
    %v171 = vld [vmem:[%s2 + $0x1] sm:$0x1]
    %v173 = vrot.slane %v167, 1
    %v175 = vmul.f32 %v170, %v173
    %v176 = vadd.f32 %v167, %v175
    %v177 = vmax.f32 %v176, 0.0
    %v178 = vmul.f32 %v176, %v171
    %v179 = vsub.f32 %v177, %v178
    %v180 = vand.u32 2147483647, %v176
    %v181 = vsub.f32 0.0, %v180
    %v182 = vmul.f32 %v181, 1.442695
    %v183 = vpow.pop %v182
    %v184 = vadd.f32 %v183, 1.0
    %v185 = vlog2.pop %v184
    %v186 = vmul.f32 %v185, 0.6931472
    %v187 = vmul.f32 -0.5, %v183
    %v188 = vadd.f32 %v187, 1.0
    %v189 = vmul.f32 %v188, %v183
    %v190 = vand.u32 2147483647, %v183
    %vm191 = vcmp.lt.f32.partialorder %v190, 0.0004427343
    %v192 = vsel %vm191, %v189, %v186
    %v193 = vadd.f32 %v179, %v192
    %vm194 = vcmask 253952
    %v195 = vsel %vm194, %v193, 0.0
    %196 = vadd.xlane.f32.xlu0 %v195
    %v197 = vpop.xlane.xlu0 %196
    %v198 = vrot.slane %v197, 4
    %v199 = vadd.f32 %v197, %v198
    %v200 = vrot.slane %v199, 2
    %v201 = vadd.f32 %v199, %v200
    %v202 = vrot.slane %v201, 1
    %v203 = vadd.f32 %v201, %v202
    %s204 = vtos %v203
    %v205 = vrcp.pop 32.0
    %v206 = vmul.f32 32.0, %v205
    %v207 = vsub.f32 1.0, %v206
    %v208 = vmul.f32 %v205, %v207
    %v209 = vadd.f32 %v205, %v208
    %vm210 = vweird.f32 %v205
    %v211 = vsel %vm210, %v205, %v209
    %s212 = vtos %v211
    %s213 = smul.f32 %s204, %s212
    %s214 = scalar_lea.smem [#allocation8], 0
    %215 = sst [smem:[%s214]] %s213
    // Predicated region
    $region42: #{tpu_custom_call.1} parent=1 // pred_check
      _
    $region43: #{tpu_custom_call.1} parent=1 // pred_check_branch
      %217 = sbr.rel (0) target = $region45
    $region44: #{tpu_custom_call.1} parent=1 // pred_region
      %219 = vsyncadd [#allocation4], 0
      %s221 = sshll.u32 %s7, 4
      %s222 = int_to_ptr.hbm [resolvable:$true] %s221
      %224 = dma.smem_to_hbm [#allocation8], 16, %s222, [#allocation4]
    $region45: #{tpu_custom_call.1} parent=1 // pred_fallthru
      _
    // Predicated region
    $region46: #{tpu_custom_call.1} parent=1 // pred_check
      _
    $region47: #{tpu_custom_call.1} parent=1 // pred_check_branch
      %226 = sbr.rel (0) target = $region49
    $region48: #{tpu_custom_call.1} parent=1 // pred_region
      %228 = dma.done [#allocation4], 16
    $region49: #{tpu_custom_call.1} parent=1 // pred_fallthru
      _
    %229 = sfence
    %230 = vsyncpa [#allocation3], 1
    %231 = vsyncpa [#allocation6], 1
    %232 = vsyncpa [#allocation4], 1

</llo_original>
